<compile_context>
chip_gen: v7x
topology: tpu7x:2x2x1
jax: 0.10.0
libtpu: 0.0.40
codegen_flags: <defaults>
</compile_context>

<pallas_src>
import numpy as np
import jax
import jax.numpy as jnp
from jax.experimental import pallas as pl
from jax.experimental.pallas import tpu as pltpu


def force_pair(v):
    """Convert v to a pair of ints, if it isn't already."""
    if isinstance(v, tuple):
        if len(v) != 2:
            raise ValueError(v)
        return (int(v[0]), int(v[1]))
    return (int(v), int(v))


def _round_up(a, b):
    return ((a + b - 1) // b) * b


def _matmul_kernel(w_ref, p_ref, o_ref, acc_ref):
    # w_ref:   (t_oc, t_k)   weight tile
    # p_ref:   (t_k,  t_n)   im2col patch tile (batch folded into N)
    # o_ref:   (t_oc, t_n)   output tile
    # acc_ref: (t_oc, t_n)   float32 accumulator, resident across the K axis
    @pl.when(pl.program_id(2) == 0)
    def _():
        acc_ref[...] = jnp.zeros_like(acc_ref)

    acc_ref[...] += jnp.dot(
        w_ref[...], p_ref[...], preferred_element_type=jnp.float32
    )

    @pl.when(pl.program_id(2) == pl.num_programs(2) - 1)
    def _():
        o_ref[...] = acc_ref[...].astype(o_ref.dtype)


def conv2d_pallas(x, weight, stride=1, padding=0):
    """Equivalent of torch.nn.functional.conv2d with bias=False.

    x:      (B, IC, H, W)
    weight: (OC, IC, KH, KW)
    returns (B, OC, OH, OW)
    """
    sh, sw = force_pair(stride)
    ph, pw = force_pair(padding)
    B, IC, H, W = x.shape
    OC, IC2, KH, KW = weight.shape
    assert IC == IC2, "in_channels for x and weights don't match up"

    x_p = jnp.pad(x, ((0, 0), (0, 0), (ph, ph), (pw, pw)))
    Hp, Wp = H + 2 * ph, W + 2 * pw
    OH = 1 + (Hp - KH) // sh
    OW = 1 + (Wp - KW) // sw

    K = IC * KH * KW
    N = B * OH * OW

    # im2col glue (XLA side); batch is folded into the matmul N dimension.
    # K ordering is ic-major, then kh, then kw -- matches weight.reshape(OC, K).
    # TODO(synk): for large KH*KW (esp. on v5e's lower HBM BW) fuse the window
    #             gather into the kernel to avoid the KH*KW activation blow-up.
    x_t = jnp.transpose(x_p, (1, 0, 2, 3))  # (IC, B, Hp, Wp)
    cols = []
    for kh in range(KH):
        for kw in range(KW):
            cols.append(x_t[:, :, kh:kh + sh * OH:sh, kw:kw + sw * OW:sw])
    patches = jnp.stack(cols, axis=1)            # (IC, KH*KW, B, OH, OW)
    patches = patches.reshape(K, N)              # (K, N)
    w2d = weight.reshape(OC, K).astype(x.dtype)  # (OC, K)

    # Tile sizes: lane dims multiples of 128, sublane dims multiples of 8.
    # Caps keep the double-buffered working set under every chip's VMEM budget.
    t_oc = min(_round_up(OC, 8), 256)
    t_k = min(_round_up(K, 128), 512)
    t_n = min(_round_up(N, 128), 512)
    OC_p = _round_up(OC, t_oc)
    K_p = _round_up(K, t_k)
    N_p = _round_up(N, t_n)

    w2d = jnp.pad(w2d, ((0, OC_p - OC), (0, K_p - K)))
    patches = jnp.pad(patches, ((0, K_p - K), (0, N_p - N)))

    grid = (OC_p // t_oc, N_p // t_n, K_p // t_k)

    itemsize = jnp.dtype(x.dtype).itemsize
    cost = pl.CostEstimate(
        flops=2 * OC_p * K_p * N_p,
        transcendentals=0,
        bytes_accessed=(OC_p * K_p + K_p * N_p + OC_p * N_p) * itemsize,
    )

    out = pl.pallas_call(
        _matmul_kernel,
        out_shape=jax.ShapeDtypeStruct((OC_p, N_p), x.dtype),
        grid_spec=pltpu.PrefetchScalarGridSpec(
            num_scalar_prefetch=0,
            grid=grid,
            in_specs=[
                pl.BlockSpec((t_oc, t_k), lambda i, j, k: (i, k)),  # weights
                pl.BlockSpec((t_k, t_n), lambda i, j, k: (k, j)),   # patches
            ],
            out_specs=pl.BlockSpec((t_oc, t_n), lambda i, j, k: (i, j)),
            scratch_shapes=[pltpu.VMEM((t_oc, t_n), jnp.float32)],
        ),
        compiler_params=pltpu.CompilerParams(
            dimension_semantics=("parallel", "parallel", "arbitrary"),
        ),
        cost_estimate=cost,
    )(w2d, patches)

    out = out[:OC, :N].reshape(OC, B, OH, OW)
    return jnp.transpose(out, (1, 0, 2, 3))


class Conv2d:
    """Same as torch.nn.Conv2d with bias=False (deterministic init)."""

    def __init__(self, in_channels, out_channels, kernel_size,
                 stride=1, padding=0, key=None):
        self.in_channels = in_channels
        self.out_channels = out_channels
        self.kernel_size = kernel_size
        self.stride = stride
        self.padding = padding
        kh, kw = force_pair(kernel_size)
        sf = 1.0 / np.sqrt(in_channels * kh * kw)
        key = jax.random.PRNGKey(0) if key is None else key
        # uniform in [-sf, sf), matching sf * (2*rand - 1)
        self.weight = sf * (
            2.0 * jax.random.uniform(
                key, (out_channels, in_channels, kh, kw), dtype=jnp.float32
            ) - 1.0
        )

    def __call__(self, x):
        return conv2d_pallas(x, self.weight, self.stride, self.padding)


if __name__ == "__main__":
    key = jax.random.PRNGKey(0)
    k_x, k_w = jax.random.split(key)

    B, IC, H, W = 2, 4, 16, 16
    OC, KS, STRIDE, PAD = 8, 3, 1, 1

    x = jax.random.normal(k_x, (B, IC, H, W), dtype=jnp.float32)
    conv = Conv2d(IC, OC, KS, stride=STRIDE, padding=PAD, key=k_w)

    out = conv(x)
    out = jax.block_until_ready(out)

    # Correctness check against XLA's native conv (same semantics as torch).
    ref = jax.lax.conv_general_dilated(
        x, conv.weight,
        window_strides=(STRIDE, STRIDE),
        padding=((PAD, PAD), (PAD, PAD)),
        dimension_numbers=("NCHW", "OIHW", "NCHW"),
    )
    assert out.shape == (B, OC, H, W), out.shape
    np.testing.assert_allclose(np.asarray(out), np.asarray(ref),
                               rtol=1e-5, atol=1e-5)

    print("KERNEL_OK")
</pallas_src>

<mosaic_0001>
module attributes {stable_mosaic.version = 11 : i64} {
  func.func @_matmul_kernel(%arg0: i32, %arg1: i32, %arg2: i32, %arg3: memref<8x128xf32, #tpu.memory_space<vmem>>, %arg4: memref<128x512xf32, #tpu.memory_space<vmem>>, %arg5: memref<8x512xf32, #tpu.memory_space<vmem>>, %arg6: memref<8x512xf32, #tpu.memory_space<vmem>>) attributes {dimension_semantics = [#tpu.dimension_semantics<parallel>, #tpu.dimension_semantics<parallel>, #tpu.dimension_semantics<arbitrary>], iteration_bounds = array<i64: 1, 1, 1>, scalar_prefetch = 0 : i64, scratch_operands = 1 : i64, tpu.core_type = #tpu.core_type<tc>, window_params = [{transform_indices = @transform_0, window_bounds = array<i64: 8, 128>}, {transform_indices = @transform_1, window_bounds = array<i64: 128, 512>}, {transform_indices = @transform_2, window_bounds = array<i64: 8, 512>}]} {
    %c0_i32 = arith.constant 0 : i32
    %0 = arith.cmpi eq, %arg2, %c0_i32 : i32
    %1 = arith.extui %0 : i1 to i32
    %c0_i32_0 = arith.constant 0 : i32
    %2 = arith.cmpi ne, %1, %c0_i32_0 : i32
    scf.if %2 {
      %cst_10 = arith.constant 0.000000e+00 : f32
      %12 = vector.broadcast %cst_10 : f32 to vector<8x512xf32>
      %c0_11 = arith.constant 0 : index
      %c0_12 = arith.constant 0 : index
      %13 = vector.load %arg6[%c0_11, %c0_12] : memref<8x512xf32, #tpu.memory_space<vmem>>, vector<8x512xf32>
      tpu.vector_store %arg6[%c0_11, %c0_12], %12 {strides = array<i32>} : memref<8x512xf32, #tpu.memory_space<vmem>>, vector<8x512xf32>,
    } else {
    }
    %c0 = arith.constant 0 : index
    %c0_1 = arith.constant 0 : index
    %3 = vector.load %arg6[%c0, %c0_1] : memref<8x512xf32, #tpu.memory_space<vmem>>, vector<8x512xf32>
    %c0_2 = arith.constant 0 : index
    %c0_3 = arith.constant 0 : index
    %4 = vector.load %arg3[%c0_2, %c0_3] : memref<8x128xf32, #tpu.memory_space<vmem>>, vector<8x128xf32>
    %c0_4 = arith.constant 0 : index
    %c0_5 = arith.constant 0 : index
    %5 = vector.load %arg4[%c0_4, %c0_5] : memref<128x512xf32, #tpu.memory_space<vmem>>, vector<128x512xf32>
    %cst = arith.constant dense<0.000000e+00> : vector<8x512xf32>
    %6 = tpu.matmul %4, %5, %cst {dimension_numbers = #tpu.dot_dimension_numbers<[1], [0], [0], [1], [0, 0, 1, 1], [], []>} : vector<8x128xf32>, vector<128x512xf32>, vector<8x512xf32> -> vector<8x512xf32>
    %7 = arith.addf %3, %6 : vector<8x512xf32>
    %c0_6 = arith.constant 0 : index
    %c0_7 = arith.constant 0 : index
    %8 = vector.load %arg6[%c0_6, %c0_7] : memref<8x512xf32, #tpu.memory_space<vmem>>, vector<8x512xf32>
    tpu.vector_store %arg6[%c0_6, %c0_7], %7 {strides = array<i32>} : memref<8x512xf32, #tpu.memory_space<vmem>>, vector<8x512xf32>,
    %c0_i32_8 = arith.constant 0 : i32
    %9 = arith.cmpi eq, %arg2, %c0_i32_8 : i32
    %10 = arith.extui %9 : i1 to i32
    %c0_i32_9 = arith.constant 0 : i32
    %11 = arith.cmpi ne, %10, %c0_i32_9 : i32
    scf.if %11 {
      %c0_10 = arith.constant 0 : index
      %c0_11 = arith.constant 0 : index
      %12 = vector.load %arg6[%c0_10, %c0_11] : memref<8x512xf32, #tpu.memory_space<vmem>>, vector<8x512xf32>
      %c0_12 = arith.constant 0 : index
      %c0_13 = arith.constant 0 : index
      %13 = vector.load %arg5[%c0_12, %c0_13] : memref<8x512xf32, #tpu.memory_space<vmem>>, vector<8x512xf32>
      tpu.vector_store %arg5[%c0_12, %c0_13], %12 {strides = array<i32>} : memref<8x512xf32, #tpu.memory_space<vmem>>, vector<8x512xf32>,
    } else {
    }
    return
  }
  func.func @transform_0(%arg0: i32, %arg1: i32, %arg2: i32) -> (i32, i32) {
    %c0_i32 = arith.constant 0 : i32
    return %arg0, %arg2 : i32, i32
  }
  func.func @transform_1(%arg0: i32, %arg1: i32, %arg2: i32) -> (i32, i32) {
    %c0_i32 = arith.constant 0 : i32
    return %arg2, %arg1 : i32, i32
  }
  func.func @transform_2(%arg0: i32, %arg1: i32, %arg2: i32) -> (i32, i32) {
    %c0_i32 = arith.constant 0 : i32
    return %arg0, %arg1 : i32, i32
  }
}

</mosaic_0001>

<llo_original>
// kernel: tpu_custom_call.1
$region0: #{tpu_custom_call.1}
  #allocation0 [shape = 'u32[]', space=smem, size = 0x4, offset = 0x4, fixed_abs, tag = 'smem constant byte address 0x4 - core index']
  #allocation1 [shape = 'u32[144,128]{1,0:T(1,128)}', space=vmem, size = 0x12000, scoped, tag = 'internal scratch']
  #allocation2 [shape = 'f32[8,512]{1,0:T(8,128)}', space=vmem, size = 0x4000, scoped, tag = 'scratch operand']
  %s0 = inlined_call_operand.hbm [shape: f32[8,128], index: 0, kind: input, shape index: {}]
  %s1 = inlined_call_operand.hbm [shape: f32[128,512], index: 1, kind: input, shape index: {}]
  %s2 = inlined_call_operand.hbm [shape: f32[8,512], index: 2, kind: output, shape index: {}]
  %s3 = sld [smem:[#allocation0]]
  $region34: #{tpu_custom_call.1} parent=0
    _
  %s5 = ssub.s32 1, %s3
  %s6 = scalar_select 0, %s5, %s3
  $region1: #{tpu_custom_call.1} parent=0
    #allocation3 [shape = 'u8[4096]{0}', space=vmem, size = 0x1000, scoped, tag = 'input window, operand 0, single buffered']
    #allocation4 [shape = 's32[1]{0}', space=sflag, size = 0x4, scoped, tag = 'scoped memory for tpu_custom_call.1']
    #allocation5 [shape = 's32[1]{0}', space=sflag, size = 0x4, scoped, tag = 'scoped memory for tpu_custom_call.1']
    #allocation6 [shape = 'u8[262144]{0}', space=vmem, size = 0x40000, scoped, tag = 'input window, operand 1, single buffered']
    #allocation7 [shape = 's32[1]{0}', space=sflag, size = 0x4, scoped, tag = 'scoped memory for tpu_custom_call.1']
    #allocation8 [shape = 'u8[16384]{0}', space=vmem, size = 0x4000, scoped, tag = 'output window, operand 0, single buffered']
    %7 = vsyncpa [#allocation4], 0
    %8 = vsyncpa [#allocation7], 0
    %9 = vsyncpa [#allocation5], 0
    // Predicated region
    $region2: #{tpu_custom_call.1} parent=1 // pred_check
      _
    $region3: #{tpu_custom_call.1} parent=1 // pred_check_branch
      %11 = sbr.rel (0) target = $region5
    $region4: #{tpu_custom_call.1} parent=1 // pred_region
      %s13 = ssub.s32 128, 128
      %14 = vsyncadd [#allocation4], %s13
      %s16 = sshll.u32 [#allocation3], 4
      %s17 = int_to_ptr.vmem [resolvable:$true] %s16
      %19 = dma.hbm_to_vmem [thread:$0]  %s0, 128, %s17, [#allocation4]
    $region5: #{tpu_custom_call.1} parent=1 // pred_fallthru
      _
    // Predicated region
    $region6: #{tpu_custom_call.1} parent=1 // pred_check
      _
    $region7: #{tpu_custom_call.1} parent=1 // pred_check_branch
      %21 = sbr.rel (0) target = $region9
    $region8: #{tpu_custom_call.1} parent=1 // pred_region
      %s23 = ssub.s32 8192, 8192
      %24 = vsyncadd [#allocation7], %s23
      %s25 = sshll.u32 [#allocation6], 4
      %s26 = int_to_ptr.vmem [resolvable:$true] %s25
      %31 = dma.hbm_to_vmem [thread:$0]  %s1, 8192, %s26, [#allocation7], 512, 512, 32
    $region9: #{tpu_custom_call.1} parent=1 // pred_fallthru
      _
    // Predicated region
    $region10: #{tpu_custom_call.1} parent=1 // pred_check
      _
    $region11: #{tpu_custom_call.1} parent=1 // pred_check_branch
      %33 = sbr.rel (0) target = $region13
    $region12: #{tpu_custom_call.1} parent=1 // pred_region
      %34 = dma.done [#allocation4], 128
    $region13: #{tpu_custom_call.1} parent=1 // pred_fallthru
      _
    // Predicated region
    $region14: #{tpu_custom_call.1} parent=1 // pred_check
      _
    $region15: #{tpu_custom_call.1} parent=1 // pred_check_branch
      %36 = sbr.rel (0) target = $region17
    $region16: #{tpu_custom_call.1} parent=1 // pred_region
      %37 = dma.done [#allocation7], 8192
    $region17: #{tpu_custom_call.1} parent=1 // pred_fallthru
      _
    %p38 = scmp.eq.s32.totalorder 0, 0
    // Predicated region
    $region18: #{tpu_custom_call.1} parent=1 // pred_check
      %p39 = pneg %p38
    $region19: #{tpu_custom_call.1} parent=1 // pred_check_branch
      %41 = sbr.rel (%p39) target = $region21
    $region20: #{tpu_custom_call.1} parent=1 // pred_region
      %42 = vst [vmem:[#allocation2] sm:$0xff] 0.0
      %43 = vst [vmem:[#allocation2 + $0x8] sm:$0xff] 0.0
      %44 = vst [vmem:[#allocation2 + $0x10] sm:$0xff] 0.0
      %45 = vst [vmem:[#allocation2 + $0x18] sm:$0xff] 0.0
    $region21: #{tpu_custom_call.1} parent=1 // pred_fallthru
      _
    %v46 = vld [vmem:[#allocation2] sm:$0xff]
    %v47 = vld [vmem:[#allocation2 + $0x8] sm:$0xff]
    %v48 = vld [vmem:[#allocation2 + $0x10] sm:$0xff]
    %v49 = vld [vmem:[#allocation2 + $0x18] sm:$0xff]
    %v50 = vld [vmem:[#allocation3] sm:$0xff]
    %v51 = vld [vmem:[#allocation6] sm:$0xff]
    %v52 = vld [vmem:[#allocation6 + $0x8] sm:$0xff]
    %v53 = vld [vmem:[#allocation6 + $0x10] sm:$0xff]
    %v54 = vld [vmem:[#allocation6 + $0x18] sm:$0xff]
    %v55 = vld [vmem:[#allocation6 + $0x20] sm:$0xff]
    %v56 = vld [vmem:[#allocation6 + $0x28] sm:$0xff]
    %v57 = vld [vmem:[#allocation6 + $0x30] sm:$0xff]
    %v58 = vld [vmem:[#allocation6 + $0x38] sm:$0xff]
    %v59 = vld [vmem:[#allocation6 + $0x40] sm:$0xff]
    %v60 = vld [vmem:[#allocation6 + $0x48] sm:$0xff]
    %v61 = vld [vmem:[#allocation6 + $0x50] sm:$0xff]
    %v62 = vld [vmem:[#allocation6 + $0x58] sm:$0xff]
    %v63 = vld [vmem:[#allocation6 + $0x60] sm:$0xff]
    %v64 = vld [vmem:[#allocation6 + $0x68] sm:$0xff]
    %v65 = vld [vmem:[#allocation6 + $0x70] sm:$0xff]
    %v66 = vld [vmem:[#allocation6 + $0x78] sm:$0xff]
    %v67 = vld [vmem:[#allocation6 + $0x80] sm:$0xff]
    %v68 = vld [vmem:[#allocation6 + $0x88] sm:$0xff]
    %v69 = vld [vmem:[#allocation6 + $0x90] sm:$0xff]
    %v70 = vld [vmem:[#allocation6 + $0x98] sm:$0xff]
    %v71 = vld [vmem:[#allocation6 + $0xa0] sm:$0xff]
    %v72 = vld [vmem:[#allocation6 + $0xa8] sm:$0xff]
    %v73 = vld [vmem:[#allocation6 + $0xb0] sm:$0xff]
    %v74 = vld [vmem:[#allocation6 + $0xb8] sm:$0xff]
    %v75 = vld [vmem:[#allocation6 + $0xc0] sm:$0xff]
    %v76 = vld [vmem:[#allocation6 + $0xc8] sm:$0xff]
    %v77 = vld [vmem:[#allocation6 + $0xd0] sm:$0xff]
    %v78 = vld [vmem:[#allocation6 + $0xd8] sm:$0xff]
    %v79 = vld [vmem:[#allocation6 + $0xe0] sm:$0xff]
    %v80 = vld [vmem:[#allocation6 + $0xe8] sm:$0xff]
    %v81 = vld [vmem:[#allocation6 + $0xf0] sm:$0xff]
    %v82 = vld [vmem:[#allocation6 + $0xf8] sm:$0xff]
    %v83 = vld [vmem:[#allocation6 + $0x100] sm:$0xff]
    %v84 = vld [vmem:[#allocation6 + $0x108] sm:$0xff]
    %v85 = vld [vmem:[#allocation6 + $0x110] sm:$0xff]
    %v86 = vld [vmem:[#allocation6 + $0x118] sm:$0xff]
    %v87 = vld [vmem:[#allocation6 + $0x120] sm:$0xff]
    %v88 = vld [vmem:[#allocation6 + $0x128] sm:$0xff]
    %v89 = vld [vmem:[#allocation6 + $0x130] sm:$0xff]
    %v90 = vld [vmem:[#allocation6 + $0x138] sm:$0xff]
    %v91 = vld [vmem:[#allocation6 + $0x140] sm:$0xff]
    %v92 = vld [vmem:[#allocation6 + $0x148] sm:$0xff]
    %v93 = vld [vmem:[#allocation6 + $0x150] sm:$0xff]
    %v94 = vld [vmem:[#allocation6 + $0x158] sm:$0xff]
    %v95 = vld [vmem:[#allocation6 + $0x160] sm:$0xff]
    %v96 = vld [vmem:[#allocation6 + $0x168] sm:$0xff]
    %v97 = vld [vmem:[#allocation6 + $0x170] sm:$0xff]
    %v98 = vld [vmem:[#allocation6 + $0x178] sm:$0xff]
    %v99 = vld [vmem:[#allocation6 + $0x180] sm:$0xff]
    %v100 = vld [vmem:[#allocation6 + $0x188] sm:$0xff]
    %v101 = vld [vmem:[#allocation6 + $0x190] sm:$0xff]
    %v102 = vld [vmem:[#allocation6 + $0x198] sm:$0xff]
    %v103 = vld [vmem:[#allocation6 + $0x1a0] sm:$0xff]
    %v104 = vld [vmem:[#allocation6 + $0x1a8] sm:$0xff]
    %v105 = vld [vmem:[#allocation6 + $0x1b0] sm:$0xff]
    %v106 = vld [vmem:[#allocation6 + $0x1b8] sm:$0xff]
    %v107 = vld [vmem:[#allocation6 + $0x1c0] sm:$0xff]
    %v108 = vld [vmem:[#allocation6 + $0x1c8] sm:$0xff]
    %v109 = vld [vmem:[#allocation6 + $0x1d0] sm:$0xff]
    %v110 = vld [vmem:[#allocation6 + $0x1d8] sm:$0xff]
    %v111 = vld [vmem:[#allocation6 + $0x1e0] sm:$0xff]
    %v112 = vld [vmem:[#allocation6 + $0x1e8] sm:$0xff]
    %v113 = vld [vmem:[#allocation6 + $0x1f0] sm:$0xff]
    %v114 = vld [vmem:[#allocation6 + $0x1f8] sm:$0xff]
    %115 = vmatprep.subr.mxu0 %v52
    %116 = vmatpush1.msra.mxu0 %v51
    %117 = vmatprep.subr.mxu0 %v56
    %118 = vmatpush1.msra.mxu0 %v55
    %119 = vmatprep.subr.mxu0 %v60
    %120 = vmatpush1.msra.mxu0 %v59
    %121 = vmatprep.subr.mxu0 %v64
    %122 = vmatpush1.msra.mxu0 %v63
    %123 = vmatprep.subr.mxu0 %v68
    %124 = vmatpush1.msra.mxu0 %v67
    %125 = vmatprep.subr.mxu0 %v72
    %126 = vmatpush1.msra.mxu0 %v71
    %127 = vmatprep.subr.mxu0 %v76
    %128 = vmatpush1.msra.mxu0 %v75
    %129 = vmatprep.subr.mxu0 %v80
    %130 = vmatpush1.msra.mxu0 %v79
    %131 = vmatprep.subr.mxu0 %v84
    %132 = vmatpush1.msra.mxu0 %v83
    %133 = vmatprep.subr.mxu0 %v88
    %134 = vmatpush1.msra.mxu0 %v87
    %135 = vmatprep.subr.mxu0 %v92
    %136 = vmatpush1.msra.mxu0 %v91
    %137 = vmatprep.subr.mxu0 %v96
    %138 = vmatpush1.msra.mxu0 %v95
    %139 = vmatprep.subr.mxu0 %v100
    %140 = vmatpush1.msra.mxu0 %v99
    %141 = vmatprep.subr.mxu0 %v104
    %142 = vmatpush1.msra.mxu0 %v103
    %143 = vmatprep.subr.mxu0 %v108
    %144 = vmatpush1.msra.mxu0 %v107
    %145 = vmatprep.subr.mxu0 %v112
    %146 = vmatpush1.msra.mxu0 %v111
    %147 = vmatprep.subr.mxu0 0.0
    %148 = vmatpush1.msra.mxu0 0.0
    %149 = vmatprep.subr.mxu0 0.0
    %150 = vmatpush1.msra.mxu0 0.0
    %151 = vmatprep.subr.mxu0 0.0
    %152 = vmatpush1.msra.mxu0 0.0
    %153 = vmatprep.subr.mxu0 0.0
    %154 = vmatpush1.msra.mxu0 0.0
    %155 = vmatprep.subr.mxu0 0.0
    %156 = vmatpush1.msra.mxu0 0.0
    %157 = vmatprep.subr.mxu0 0.0
    %158 = vmatpush1.msra.mxu0 0.0
    %159 = vmatprep.subr.mxu0 0.0
    %160 = vmatpush1.msra.mxu0 0.0
    %161 = vmatprep.subr.mxu0 0.0
    %162 = vmatpush1.msra.mxu0 0.0
    %163 = vmatprep.subr.mxu0 0.0
    %164 = vmatpush1.msra.mxu0 0.0
    %165 = vmatprep.subr.mxu0 0.0
    %166 = vmatpush1.msra.mxu0 0.0
    %167 = vmatprep.subr.mxu0 0.0
    %168 = vmatpush1.msra.mxu0 0.0
    %169 = vmatprep.subr.mxu0 0.0
    %170 = vmatpush1.msra.mxu0 0.0
    %171 = vmatprep.subr.mxu0 0.0
    %172 = vmatpush1.msra.mxu0 0.0
    %173 = vmatprep.subr.mxu0 0.0
    %174 = vmatpush1.msra.mxu0 0.0
    %175 = vmatprep.subr.mxu0 0.0
    %176 = vmatpush1.msra.mxu0 0.0
    %177 = vmatprep.subr.mxu0 0.0
    %178 = vmatpush1.msra.mxu0 0.0
    %179 = vmatprep.mubr.f32.mxu0 0.0
    %180 = vmatmul.mubr.f32.gmra.mrb[0].mxu0 %v50
    %v181 = vpop.f32.mrb[0].mxu0
    %v182 = vadd.f32 0.0, %v181
    %v183 = vpop.f32.mrb[0].mxu0
    %v184 = vadd.f32 0.0, %v183
    %185 = vdwg.mxu0
    %186 = vmatprep.subr.mxu0 %v54
    %187 = vmatpush1.msra.mxu0 %v53
    %188 = vmatprep.subr.mxu0 %v58
    %189 = vmatpush1.msra.mxu0 %v57
    %190 = vmatprep.subr.mxu0 %v62
    %191 = vmatpush1.msra.mxu0 %v61
    %192 = vmatprep.subr.mxu0 %v66
    %193 = vmatpush1.msra.mxu0 %v65
    %194 = vmatprep.subr.mxu0 %v70
    %195 = vmatpush1.msra.mxu0 %v69
    %196 = vmatprep.subr.mxu0 %v74
    %197 = vmatpush1.msra.mxu0 %v73
    %198 = vmatprep.subr.mxu0 %v78
    %199 = vmatpush1.msra.mxu0 %v77
    %200 = vmatprep.subr.mxu0 %v82
    %201 = vmatpush1.msra.mxu0 %v81
    %202 = vmatprep.subr.mxu0 %v86
    %203 = vmatpush1.msra.mxu0 %v85
    %204 = vmatprep.subr.mxu0 %v90
    %205 = vmatpush1.msra.mxu0 %v89
    %206 = vmatprep.subr.mxu0 %v94
    %207 = vmatpush1.msra.mxu0 %v93
    %208 = vmatprep.subr.mxu0 %v98
    %209 = vmatpush1.msra.mxu0 %v97
    %210 = vmatprep.subr.mxu0 %v102
    %211 = vmatpush1.msra.mxu0 %v101
    %212 = vmatprep.subr.mxu0 %v106
    %213 = vmatpush1.msra.mxu0 %v105
    %214 = vmatprep.subr.mxu0 %v110
    %215 = vmatpush1.msra.mxu0 %v109
    %216 = vmatprep.subr.mxu0 %v114
    %217 = vmatpush1.msra.mxu0 %v113
    %218 = vmatprep.subr.mxu0 0.0
    %219 = vmatpush1.msra.mxu0 0.0
    %220 = vmatprep.subr.mxu0 0.0
    %221 = vmatpush1.msra.mxu0 0.0
    %222 = vmatprep.subr.mxu0 0.0
    %223 = vmatpush1.msra.mxu0 0.0
    %224 = vmatprep.subr.mxu0 0.0
    %225 = vmatpush1.msra.mxu0 0.0
    %226 = vmatprep.subr.mxu0 0.0
    %227 = vmatpush1.msra.mxu0 0.0
    %228 = vmatprep.subr.mxu0 0.0
    %229 = vmatpush1.msra.mxu0 0.0
    %230 = vmatprep.subr.mxu0 0.0
    %231 = vmatpush1.msra.mxu0 0.0
    %232 = vmatprep.subr.mxu0 0.0
    %233 = vmatpush1.msra.mxu0 0.0
    %234 = vmatprep.subr.mxu0 0.0
    %235 = vmatpush1.msra.mxu0 0.0
    %236 = vmatprep.subr.mxu0 0.0
    %237 = vmatpush1.msra.mxu0 0.0
    %238 = vmatprep.subr.mxu0 0.0
    %239 = vmatpush1.msra.mxu0 0.0
    %240 = vmatprep.subr.mxu0 0.0
    %241 = vmatpush1.msra.mxu0 0.0
    %242 = vmatprep.subr.mxu0 0.0
    %243 = vmatpush1.msra.mxu0 0.0
    %244 = vmatprep.subr.mxu0 0.0
    %245 = vmatpush1.msra.mxu0 0.0
    %246 = vmatprep.subr.mxu0 0.0
    %247 = vmatpush1.msra.mxu0 0.0
    %248 = vmatprep.subr.mxu0 0.0
    %249 = vmatpush1.msra.mxu0 0.0
    %250 = vmatprep.mubr.f32.mxu0 0.0
    %251 = vmatmul.mubr.f32.gmra.mrb[0].mxu0 %v50
    %v252 = vpop.f32.mrb[0].mxu0
    %v253 = vadd.f32 0.0, %v252
    %v254 = vpop.f32.mrb[0].mxu0
    %v255 = vadd.f32 0.0, %v254
    %256 = vdwg.mxu0
    %v257 = vadd.f32 %v46, %v182
    %v258 = vadd.f32 %v47, %v184
    %v259 = vadd.f32 %v48, %v253
    %v260 = vadd.f32 %v49, %v255
    %261 = vst [vmem:[#allocation2] sm:$0xff] %v257
    %262 = vst [vmem:[#allocation2 + $0x8] sm:$0xff] %v258
    %263 = vst [vmem:[#allocation2 + $0x10] sm:$0xff] %v259
    %264 = vst [vmem:[#allocation2 + $0x18] sm:$0xff] %v260
    // Predicated region
    $region22: #{tpu_custom_call.1} parent=1 // pred_check
      %p265 = pneg %p38
    $region23: #{tpu_custom_call.1} parent=1 // pred_check_branch
      %267 = sbr.rel (%p265) target = $region25
    $region24: #{tpu_custom_call.1} parent=1 // pred_region
      %v268 = vld [vmem:[#allocation2] sm:$0xff]
      %v269 = vld [vmem:[#allocation2 + $0x8] sm:$0xff]
      %v270 = vld [vmem:[#allocation2 + $0x10] sm:$0xff]
      %v271 = vld [vmem:[#allocation2 + $0x18] sm:$0xff]
      %272 = vst [vmem:[#allocation8] sm:$0xff] %v268
      %273 = vst [vmem:[#allocation8 + $0x8] sm:$0xff] %v269
      %274 = vst [vmem:[#allocation8 + $0x10] sm:$0xff] %v270
      %275 = vst [vmem:[#allocation8 + $0x18] sm:$0xff] %v271
    $region25: #{tpu_custom_call.1} parent=1 // pred_fallthru
      _
    // Predicated region
    $region26: #{tpu_custom_call.1} parent=1 // pred_check
      _
    $region27: #{tpu_custom_call.1} parent=1 // pred_check_branch
      %277 = sbr.rel (0) target = $region29
    $region28: #{tpu_custom_call.1} parent=1 // pred_region
      %s279 = ssub.s32 512, 512
      %280 = vsyncadd [#allocation5], %s279
      %s282 = sshll.u32 [#allocation8], 4
      %s283 = int_to_ptr.vmem [resolvable:$true] %s282
      %285 = dma.vmem_to_hbm [thread:$0]  %s283, 512, %s2, [#allocation5]
    $region29: #{tpu_custom_call.1} parent=1 // pred_fallthru
      _
    // Predicated region
    $region30: #{tpu_custom_call.1} parent=1 // pred_check
      _
    $region31: #{tpu_custom_call.1} parent=1 // pred_check_branch
      %287 = sbr.rel (0) target = $region33
    $region32: #{tpu_custom_call.1} parent=1 // pred_region
      %288 = dma.done [#allocation5], 512
    $region33: #{tpu_custom_call.1} parent=1 // pred_fallthru
      _
    %289 = vsyncpa [#allocation4], 1
    %290 = vsyncpa [#allocation7], 1
    %291 = vsyncpa [#allocation5], 1

</llo_original>
